<compile_context>
chip_gen: v7x
topology: tpu7x:2x2x1
jax: 0.10.0
libtpu: 0.0.40
codegen_flags: <defaults>
</compile_context>

<pallas_src>
import math
import functools

import jax
import jax.numpy as jnp
import numpy as np
from jax import lax
from jax.experimental import pallas as pl
from jax.experimental.pallas import tpu as pltpu


def _hw_config():
    """Generation-specific VMEM budget and tile targets."""
    vmem_bytes = 64 * 1024 * 1024
    try:
        vmem_bytes = int(getattr(pltpu.get_tpu_info(), "vmem_capacity_bytes",
                                 vmem_bytes))
    except Exception:
        pass
    if vmem_bytes >= 128 * 1024 * 1024:
        # v5e / v6e: 128 MiB physical VMEM -> bigger tiles, 96 MiB budget.
        return dict(vmem_limit_bytes=96 * 1024 * 1024, tm=512, tn=512, tq=256)
    # v7x: 64 MiB physical VMEM -> keep headroom.
    return dict(vmem_limit_bytes=48 * 1024 * 1024, tm=256, tn=256, tq=256)


_CFG = _hw_config()


def _pick_tile(dim, target, align):
    """Largest divisor of `dim` <= target that is a multiple of `align`.

    Falls back to the FULL dimension (always a legal block shape) rather than
    a non-lane-aligned partial tile, so lane tiles are either 128-aligned or
    full-extent.
    """
    if dim <= target:
        return dim
    for t in range(target, 0, -1):
        if dim % t == 0 and t % align == 0:
            return t
    return dim


# ---------------------------------------------------------------------------
# Kernel 1: tiled linear (addmm)   y = x @ W + b     (c_attn, c_proj)
# ---------------------------------------------------------------------------
def _linear_kernel(x_ref, w_ref, b_ref, o_ref):
    # Full-K block per grid step: one bf16 MXU matmul with f32 accumulation,
    # bias add and bf16 cast on the way out. No accumulator scratch needed.
    acc = jnp.dot(x_ref[...], w_ref[...], preferred_element_type=jnp.float32)
    o_ref[...] = (acc + b_ref[...]).astype(o_ref.dtype)


def linear(x2d, w, b, *, out_dtype=jnp.bfloat16, tm_target=None, tn_target=None):
    """x2d: (M, K) bf16, w: (K, N) bf16, b: (N,) f32 -> (M, N) out_dtype.

    2-D grid (M/tm, N/tn); the whole K axis lives in one VMEM block (K is
    d_model or d_model*3, easily resident), which removes grid-step overhead
    on K and lets the x block (index invariant across the inner N axis) be
    DMA'd once per row tile.
    """
    M, K = x2d.shape
    N = w.shape[1]
    tm = _pick_tile(M, tm_target or _CFG["tm"], 8)
    tn = _pick_tile(N, tn_target or _CFG["tn"], 128)
    grid = (M // tm, N // tn)
    return pl.pallas_call(
        _linear_kernel,
        out_shape=jax.ShapeDtypeStruct((M, N), out_dtype),
        grid=grid,
        in_specs=[
            pl.BlockSpec((tm, K), lambda i, j: (i, 0)),
            pl.BlockSpec((K, tn), lambda i, j: (0, j)),
            pl.BlockSpec((1, tn), lambda i, j: (0, j)),
        ],
        out_specs=pl.BlockSpec((tm, tn), lambda i, j: (i, j)),
        compiler_params=pltpu.CompilerParams(
            dimension_semantics=("parallel", "parallel"),
            vmem_limit_bytes=_CFG["vmem_limit_bytes"],
        ),
    )(x2d, w, b.reshape(1, N).astype(jnp.float32))


# ---------------------------------------------------------------------------
# Kernel 2: attention over all heads for one (batch, query-tile) block
# ---------------------------------------------------------------------------
def _attn_kernel(q_ref, k_ref, v_ref, bias_ref, o_ref, s_ref=None, *,
                 n_head, d_k):
    # q_ref: (1, tq, d_model) bf16; k_ref/v_ref: (1, S, d_model) bf16 column
    # blocks of the fused c_attn output; bias_ref: (1, S) f32 additive mask.
    # 1/sqrt(d_k) is already folded into the q columns of c_attn.
    bias = bias_ref[...]                                            # (1, S)
    for h in range(n_head):
        lo = h * d_k
        qh = q_ref[0, :, lo:lo + d_k]                               # (tq, d_k)
        kh = k_ref[0, :, lo:lo + d_k]                               # (S,  d_k)
        vh = v_ref[0, :, lo:lo + d_k]                               # (S,  d_k)

        # q @ k^T without an explicit transpose (contract last dim of both).
        s = lax.dot_general(qh, kh, (((1,), (1,)), ((), ())),
                            preferred_element_type=jnp.float32)    # (tq, S)
        s = s + bias

        m = jnp.max(s, axis=-1, keepdims=True)
        p = jnp.exp(s - m)
        l = jnp.sum(p, axis=-1, keepdims=True)

        if s_ref is not None:
            # Exact normalization on the path that is returned to the caller.
            p = p / l
            s_ref[0, h] = p.astype(s_ref.dtype)
            ctx = jnp.dot(p.astype(jnp.bfloat16), vh,
                          preferred_element_type=jnp.float32)       # (tq, d_k)
        else:
            # Defer normalization: scale the small (tq, d_k) context with the
            # approx EUP reciprocal instead of the (tq, S) probabilities.
            ctx = jnp.dot(p.astype(jnp.bfloat16), vh,
                          preferred_element_type=jnp.float32)
            ctx = ctx * pl.reciprocal(l, approx=True)

        # Write each head into its column slot as it finishes; the pipelined
        # output block stays a lane-dense (1, tq, d_model) slab, and no
        # concatenate / 12-head live f32 context set is kept around.
        o_ref[0, :, lo:lo + d_k] = ctx.astype(o_ref.dtype)


def attention(qkv, mask_bias, *, n_head, d_model, return_scores=True,
              score_dtype=jnp.bfloat16, q_tile_target=None):
    """qkv: (B, S, 3*d_model) bf16 fused c_attn output; mask_bias: (B, S) f32.

    Returns (context (B, S, d_model) bf16, scores (B, H, S, S) or None).
    """
    B, S, _ = qkv.shape
    d_k = d_model // n_head
    tq = _pick_tile(S, q_tile_target or _CFG["tq"], 8)
    grid = (B, S // tq)

    kernel = functools.partial(_attn_kernel, n_head=n_head, d_k=d_k)

    in_specs = [
        pl.BlockSpec((1, tq, d_model), lambda b, qi: (b, qi, 0)),   # Q columns
        # K/V column blocks of the fused c_attn output; block index is
        # invariant across the inner qi axis, so they stay resident in VMEM
        # (no re-DMA per query tile).
        pl.BlockSpec((1, S, d_model), lambda b, qi: (b, 0, 1)),     # K columns
        pl.BlockSpec((1, S, d_model), lambda b, qi: (b, 0, 2)),     # V columns
        pl.BlockSpec((1, S), lambda b, qi: (b, 0)),                 # mask bias
    ]
    out_shape = [jax.ShapeDtypeStruct((B, S, d_model), jnp.bfloat16)]
    out_specs = [pl.BlockSpec((1, tq, d_model), lambda b, qi: (b, qi, 0))]
    if return_scores:
        out_shape.append(jax.ShapeDtypeStruct((B, n_head, S, S), score_dtype))
        out_specs.append(
            pl.BlockSpec((1, n_head, tq, S), lambda b, qi: (b, 0, qi, 0)))

    results = pl.pallas_call(
        kernel,
        out_shape=tuple(out_shape),
        grid=grid,
        in_specs=in_specs,
        out_specs=tuple(out_specs),
        compiler_params=pltpu.CompilerParams(
            dimension_semantics=("parallel", "arbitrary"),
            vmem_limit_bytes=_CFG["vmem_limit_bytes"],
        ),
    )(qkv, qkv, qkv, mask_bias)

    if return_scores:
        return results[0], results[1]
    return results[0], None


# ---------------------------------------------------------------------------
# Param prep (one-time) + module wrapper (glue is reshapes only)
# ---------------------------------------------------------------------------
def prepare_params(params, d_model, n_head):
    """Fold 1/sqrt(d_k) into the q columns of c_attn and pre-cast weights to
    bf16 so both GEMMs read bf16 from HBM. Call once at setup."""
    d_k = d_model // n_head
    scale = 1.0 / math.sqrt(d_k)
    col_scale = jnp.concatenate([
        jnp.full((d_model,), scale, jnp.float32),
        jnp.ones((2 * d_model,), jnp.float32),
    ])
    return {
        "c_attn_w": (params["c_attn_w"] * col_scale[None, :]).astype(jnp.bfloat16),
        "c_attn_b": (params["c_attn_b"] * col_scale).astype(jnp.float32),
        "c_proj_w": params["c_proj_w"].astype(jnp.bfloat16),
        "c_proj_b": params["c_proj_b"].astype(jnp.float32),
    }


def multi_head_attention(x, attention_mask, prepared, n_head,
                         return_scores=True, score_dtype=jnp.bfloat16):
    """x: (B, S, d_model), attention_mask: (B, S) with 1.0 = attend."""
    B, S, d_model = x.shape
    x_bf16 = x.astype(jnp.bfloat16)

    # c_attn: fused qkv projection (bf16 in, bf16 out -> half the qkv HBM traffic)
    qkv = linear(x_bf16.reshape(B * S, d_model),
                 prepared["c_attn_w"], prepared["c_attn_b"])
    qkv = qkv.reshape(B, S, 3 * d_model)

    # additive mask bias computed once per batch (not per head / grid step)
    mask_bias = ((1.0 - attention_mask) * -10000.0).astype(jnp.float32)

    out, scores = attention(qkv, mask_bias, n_head=n_head, d_model=d_model,
                            return_scores=return_scores, score_dtype=score_dtype)

    # c_proj
    out = linear(out.reshape(B * S, d_model),
                 prepared["c_proj_w"], prepared["c_proj_b"])
    return out.reshape(B, S, d_model), scores


# ---------------------------------------------------------------------------
# Pure-JAX f32 reference for a sanity check
# ---------------------------------------------------------------------------
def reference(x, attention_mask, params, n_head):
    B, S, d_model = x.shape
    d_k = d_model // n_head
    qkv = x.reshape(-1, d_model) @ params["c_attn_w"] + params["c_attn_b"]
    qkv = qkv.reshape(B, S, 3 * d_model)
    q, k, v = jnp.split(qkv, 3, axis=2)
    sh = lambda t: t.reshape(B, S, n_head, d_k).transpose(0, 2, 1, 3)
    q, k, v = sh(q), sh(k), sh(v)
    sc = jnp.einsum("bhqd,bhkd->bhqk", q, k) / math.sqrt(d_k)
    sc = sc + ((1.0 - attention_mask) * -10000.0)[:, None, None, :]
    p = jax.nn.softmax(sc, axis=-1)
    out = jnp.einsum("bhqk,bhkd->bhqd", p, v)
    out = out.transpose(0, 2, 1, 3).reshape(B, S, d_model)
    out = out.reshape(-1, d_model) @ params["c_proj_w"] + params["c_proj_b"]
    return out.reshape(B, S, d_model), p


if __name__ == "__main__":
    # d_model = 128 keeps per-head column slices lane-resident while staying
    # a small test size.
    B, S, d_model, n_head = 2, 8, 128, 4

    key = jax.random.PRNGKey(0)
    k_x, k_w1, k_b1, k_w2, k_b2 = jax.random.split(key, 5)

    # Deterministic params (normal std=0.02 like the module; small random
    # biases to exercise the bias + scale-folding path).
    params = {
        "c_attn_w": 0.02 * jax.random.normal(k_w1, (d_model, 3 * d_model), jnp.float32),
        "c_attn_b": 0.02 * jax.random.normal(k_b1, (3 * d_model,), jnp.float32),
        "c_proj_w": 0.02 * jax.random.normal(k_w2, (d_model, d_model), jnp.float32),
        "c_proj_b": 0.02 * jax.random.normal(k_b2, (d_model,), jnp.float32),
    }

    x = jax.random.normal(k_x, (B, S, d_model), jnp.float32)
    # attention mask: 1.0 = attend, 0.0 = masked; last 2 tokens of batch 1
    # masked to exercise the masking path.
    attention_mask = jnp.ones((B, S), jnp.float32).at[1, -2:].set(0.0)

    prepared = prepare_params(params, d_model, n_head)

    out, scores = multi_head_attention(x, attention_mask, prepared, n_head)
    out = jax.block_until_ready(out)
    scores = jax.block_until_ready(scores)

    out_ref, scores_ref = reference(x, attention_mask, params, n_head)
    out_np = np.asarray(out.astype(jnp.float32))
    scores_np = np.asarray(scores.astype(jnp.float32))
    # Tolerances account for the bf16 HBM-boundary pipeline (f32 accumulation).
    assert np.allclose(out_np, np.asarray(out_ref), atol=1e-2, rtol=5e-2), "context mismatch"
    assert np.allclose(scores_np, np.asarray(scores_ref), atol=1e-2, rtol=5e-2), "scores mismatch"

    # Also exercise the no-score (inference) fast path that skips the
    # (B, H, S, S) HBM writeback entirely.
    out2, none_scores = multi_head_attention(x, attention_mask, prepared, n_head,
                                             return_scores=False)
    out2 = jax.block_until_ready(out2)
    assert none_scores is None
    assert np.allclose(np.asarray(out2.astype(jnp.float32)), np.asarray(out_ref),
                       atol=1e-2, rtol=5e-2), "no-score context mismatch"

    print("KERNEL_OK")
</pallas_src>

<mosaic_0001>
module attributes {stable_mosaic.version = 11 : i64} {
  func.func @_linear_kernel(%arg0: i32, %arg1: i32, %arg2: memref<16x128xbf16, #tpu.memory_space<vmem>>, %arg3: memref<128x128xbf16, #tpu.memory_space<vmem>>, %arg4: memref<1x128xf32, #tpu.memory_space<vmem>>, %arg5: memref<16x128xbf16, #tpu.memory_space<vmem>>) attributes {dimension_semantics = [#tpu.dimension_semantics<parallel>, #tpu.dimension_semantics<parallel>], iteration_bounds = array<i64: 1, 3>, scalar_prefetch = 0 : i64, scratch_operands = 0 : i64, tpu.core_type = #tpu.core_type<tc>, window_params = [{transform_indices = @transform_0, window_bounds = array<i64: 16, 128>}, {transform_indices = @transform_1, window_bounds = array<i64: 128, 128>}, {transform_indices = @transform_2, window_bounds = array<i64: 1, 128>}, {transform_indices = @transform_3, window_bounds = array<i64: 16, 128>}]} {
    %c0 = arith.constant 0 : index
    %c0_0 = arith.constant 0 : index
    %0 = vector.load %arg2[%c0, %c0_0] : memref<16x128xbf16, #tpu.memory_space<vmem>>, vector<16x128xbf16>
    %c0_1 = arith.constant 0 : index
    %c0_2 = arith.constant 0 : index
    %1 = vector.load %arg3[%c0_1, %c0_2] : memref<128x128xbf16, #tpu.memory_space<vmem>>, vector<128x128xbf16>
    %cst = arith.constant dense<0.000000e+00> : vector<16x128xf32>
    %2 = tpu.matmul %0, %1, %cst {dimension_numbers = #tpu.dot_dimension_numbers<[1], [0], [0], [1], [0, 0, 1, 1], [], []>} : vector<16x128xbf16>, vector<128x128xbf16>, vector<16x128xf32> -> vector<16x128xf32>
    %c0_3 = arith.constant 0 : index
    %c0_4 = arith.constant 0 : index
    %3 = vector.load %arg4[%c0_3, %c0_4] : memref<1x128xf32, #tpu.memory_space<vmem>>, vector<1x128xf32>
    %4 = vector.broadcast %3 : vector<1x128xf32> to vector<16x128xf32>
    %5 = arith.addf %2, %4 : vector<16x128xf32>
    %6 = arith.truncf %5 : vector<16x128xf32> to vector<16x128xbf16>
    %c0_5 = arith.constant 0 : index
    %c0_6 = arith.constant 0 : index
    %7 = vector.load %arg5[%c0_5, %c0_6] : memref<16x128xbf16, #tpu.memory_space<vmem>>, vector<16x128xbf16>
    tpu.vector_store %arg5[%c0_5, %c0_6], %6 {strides = array<i32>} : memref<16x128xbf16, #tpu.memory_space<vmem>>, vector<16x128xbf16>,
    return
  }
  func.func @transform_0(%arg0: i32, %arg1: i32) -> (i32, i32) {
    %c0_i32 = arith.constant 0 : i32
    %c0_i32_0 = arith.constant 0 : i32
    return %arg0, %c0_i32 : i32, i32
  }
  func.func @transform_1(%arg0: i32, %arg1: i32) -> (i32, i32) {
    %c0_i32 = arith.constant 0 : i32
    %c0_i32_0 = arith.constant 0 : i32
    return %c0_i32, %arg1 : i32, i32
  }
  func.func @transform_2(%arg0: i32, %arg1: i32) -> (i32, i32) {
    %c0_i32 = arith.constant 0 : i32
    %c0_i32_0 = arith.constant 0 : i32
    return %c0_i32, %arg1 : i32, i32
  }
  func.func @transform_3(%arg0: i32, %arg1: i32) -> (i32, i32) {
    %c0_i32 = arith.constant 0 : i32
    return %arg0, %arg1 : i32, i32
  }
}

</mosaic_0001>

<llo_original>
// kernel: tpu_custom_call.1
$region0: #{tpu_custom_call.1}
  #allocation0 [shape = 'u32[]', space=smem, size = 0x4, offset = 0x4, fixed_abs, tag = 'smem constant byte address 0x4 - core index']
  #allocation1 [shape = 'u32[144,128]{1,0:T(1,128)}', space=vmem, size = 0x12000, scoped, tag = 'internal scratch']
  %s0 = inlined_call_operand.hbm [shape: bf16[16,128], index: 0, kind: input, shape index: {}]
  %s1 = inlined_call_operand.hbm [shape: bf16[128,384], index: 1, kind: input, shape index: {}]
  %s2 = inlined_call_operand.vmem [shape: f32[1,384], index: 2, kind: input, shape index: {}]
  %s3 = inlined_call_operand.hbm [shape: bf16[16,384], index: 3, kind: output, shape index: {}]
  %s4 = sld [smem:[#allocation0]]
  $region53: #{tpu_custom_call.1} parent=0
    _
  %s6 = ssub.s32 1, %s4
  %s7 = scalar_select 0, %s6, %s4
  $region1: #{tpu_custom_call.1} parent=0
    #allocation2 [shape = 'u8[4096]{0}', space=vmem, size = 0x1000, scoped, tag = 'input window, operand 0, single buffered']
    #allocation3 [shape = 's32[2]{0}', space=sflag, size = 0x8, scoped, tag = 'scoped memory for tpu_custom_call.1']
    #allocation4 [shape = 's32[2]{0}', space=sflag, size = 0x8, scoped, tag = 'scoped memory for tpu_custom_call.1']
    #allocation5 [shape = 'u8[65536]{0}', space=vmem, size = 0x10000, scoped, tag = 'input window, operand 1']
    #allocation6 [shape = 's32[2]{0}', space=sflag, size = 0x8, scoped, tag = 'scoped memory for tpu_custom_call.1']
    #allocation7 [shape = 'u8[8192]{0}', space=vmem, size = 0x2000, scoped, tag = 'output window, operand 0']
    %8 = vsyncpa [#allocation3], 0
    %9 = vsyncpa [#allocation6], 0
    %s10 = scalar_lea.sflag [#allocation6], 1
    %11 = vsyncpa %s10, 0
    %12 = vsyncpa [#allocation4], 0
    %s13 = scalar_lea.sflag [#allocation4], 1
    %14 = vsyncpa %s13, 0
    loop: start=0, step=1, limit=5
    $region2: #{tpu_custom_call.1} parent=1 // loop_pre_header
      _
    $region3: #{tpu_custom_call.1} parent=1 // loop_header
      %s16 = sphi 0, %s20
      %p17 = scmp.ge.s32.totalorder %s16, 5
      %s23 = sphi 0, %s35
      %s24 = sphi 0, %s31
      %s25 = sphi 0, %s23
      %s26 = sphi 0, %s24
      %s27 = sphi 0, %s25
      %s28 = sphi 0, %s26
      %s38 = sphi 0, %s40
      %s41 = sphi 0, %s38
      %s42 = sphi 0, %s41
      %s58 = sphi 0, %s42
      %s64 = sphi 0, %s66
      %s67 = sphi 0, %s64
      %s68 = sphi 0, %s67
      %s84 = sphi 0, %s68
      %s90 = sphi 0, %s92
      %s93 = sphi 0, %s90
      %s94 = sphi 0, %s93
      %s110 = sphi 0, %s94
      %s118 = sphi 0, %s120
      %s121 = sphi 0, %s118
      %s122 = sphi 0, %s121
      %s138 = sphi 0, %s122
    $region4: #{tpu_custom_call.1} parent=1 // loop_header_branch
      %19 = sbr.rel (%p17) target = $region8
    $region5: #{tpu_custom_call.1} parent=1 // loop_body
      %s21 = ssub.s32 %s16, 1
      %s22 = ssub.s32 %s16, 2
      %s29 = sadd.s32 1, %s24
      %p30 = scmp.ge.s32.totalorder %s29, 3
      %s31 = scalar_select %p30, 0, %s29
      %s32 = sadd.s32 1, %s23
      %s33 = scalar_select %p30, %s32, %s23
      %p34 = scmp.ge.s32.totalorder %s33, 1
      %s35 = scalar_select %p34, 0, %s33
      %s36 = ssub.s32 %s23, %s35
      %p37 = scmp.eq.s32.totalorder %s36, 0
      %s39 = sadd.s32 %s38, 1
      %s40 = scalar_select %p37, %s38, %s39
      %p43 = pneg %p37
      %p44 = scmp.eq.s32.totalorder %s16, 2
      %p45 = por %p43, %p44
      %p46 = scmp.ne.s32.totalorder %s38, %s41
      %p47 = scmp.eq.s32.totalorder %s16, 0
      %p48 = por %p46, %p47
      %p49 = scmp.ne.s32.totalorder %s38, %s41
      %p50 = scmp.eq.s32.totalorder %s21, 2
      %p51 = por %p49, %p50
      %p52 = scmp.ne.s32.totalorder %s41, %s42
      %p53 = scmp.eq.s32.totalorder %s21, 0
      %p54 = por %p52, %p53
      %p55 = scmp.ne.s32.totalorder %s41, %s42
      %p56 = scmp.eq.s32.totalorder %s22, 2
      %p57 = por %p55, %p56
      %p59 = scmp.ne.s32.totalorder %s42, %s58
      %p60 = scmp.eq.s32.totalorder %s22, 0
      %p61 = por %p59, %p60
      %s62 = ssub.s32 %s24, %s31
      %p63 = scmp.eq.s32.totalorder %s62, 0
      %s65 = sadd.s32 %s64, 1
      %s66 = scalar_select %p63, %s64, %s65
      %p69 = pneg %p63
      %p70 = scmp.eq.s32.totalorder %s16, 2
      %p71 = por %p69, %p70
      %p72 = scmp.ne.s32.totalorder %s64, %s67
      %p73 = scmp.eq.s32.totalorder %s16, 0
      %p74 = por %p72, %p73
      %p75 = scmp.ne.s32.totalorder %s64, %s67
      %p76 = scmp.eq.s32.totalorder %s21, 2
      %p77 = por %p75, %p76
      %p78 = scmp.ne.s32.totalorder %s67, %s68
      %p79 = scmp.eq.s32.totalorder %s21, 0
      %p80 = por %p78, %p79
      %p81 = scmp.ne.s32.totalorder %s67, %s68
      %p82 = scmp.eq.s32.totalorder %s22, 2
      %p83 = por %p81, %p82
      %p85 = scmp.ne.s32.totalorder %s68, %s84
      %p86 = scmp.eq.s32.totalorder %s22, 0
      %p87 = por %p85, %p86
      %s88 = ssub.s32 %s24, %s31
      %p89 = scmp.eq.s32.totalorder %s88, 0
      %s91 = sadd.s32 %s90, 1
      %s92 = scalar_select %p89, %s90, %s91
      %p95 = pneg %p89
      %p96 = scmp.eq.s32.totalorder %s16, 2
      %p97 = por %p95, %p96
      %p98 = scmp.ne.s32.totalorder %s90, %s93
      %p99 = scmp.eq.s32.totalorder %s16, 0
      %p100 = por %p98, %p99
      %p101 = scmp.ne.s32.totalorder %s90, %s93
      %p102 = scmp.eq.s32.totalorder %s21, 2
      %p103 = por %p101, %p102
      %p104 = scmp.ne.s32.totalorder %s93, %s94
      %p105 = scmp.eq.s32.totalorder %s21, 0
      %p106 = por %p104, %p105
      %p107 = scmp.ne.s32.totalorder %s93, %s94
      %p108 = scmp.eq.s32.totalorder %s22, 2
      %p109 = por %p107, %p108
      %p111 = scmp.ne.s32.totalorder %s94, %s110
      %p112 = scmp.eq.s32.totalorder %s22, 0
      %p113 = por %p111, %p112
      %s114 = ssub.s32 %s23, %s35
      %s115 = ssub.s32 %s24, %s31
      %s116 = sor.u32 %s114, %s115
      %p117 = scmp.eq.s32.totalorder %s116, 0
      %s119 = sadd.s32 %s118, 1
      %s120 = scalar_select %p117, %s118, %s119
      %p123 = pneg %p117
      %p124 = scmp.eq.s32.totalorder %s16, 2
      %p125 = por %p123, %p124
      %p126 = scmp.ne.s32.totalorder %s118, %s121
      %p127 = scmp.eq.s32.totalorder %s16, 0
      %p128 = por %p126, %p127
      %p129 = scmp.ne.s32.totalorder %s118, %s121
      %p130 = scmp.eq.s32.totalorder %s21, 2
      %p131 = por %p129, %p130
      %p132 = scmp.ne.s32.totalorder %s121, %s122
      %p133 = scmp.eq.s32.totalorder %s21, 0
      %p134 = por %p132, %p133
      %p135 = scmp.ne.s32.totalorder %s121, %s122
      %p136 = scmp.eq.s32.totalorder %s22, 2
      %p137 = por %p135, %p136
      %p139 = scmp.ne.s32.totalorder %s122, %s138
      %p140 = scmp.eq.s32.totalorder %s22, 0
      %p141 = por %p139, %p140
      %p142 = scmp.le.s32.totalorder 1, %s16
      %p143 = scmp.lt.s32.totalorder %s16, 4
      %p144 = pnand %p142, %p143
      %p145 = pneg %p144
      // Predicated region
      $region9: #{tpu_custom_call.1} parent=5 // pred_check
        _
      $region10: #{tpu_custom_call.1} parent=5 // pred_check_branch
        %147 = sbr.rel (%p144) target = $region12
      $region11: #{tpu_custom_call.1} parent=5 // pred_region
        %s148 = ssub.s32 %s16, 1
        // Predicated region
        $region13: #{tpu_custom_call.1} parent=11 // pred_check
          %p149 = pneg %p54
        $region14: #{tpu_custom_call.1} parent=11 // pred_check_branch
          %151 = sbr.rel (%p149) target = $region16
        $region15: #{tpu_custom_call.1} parent=11 // pred_region
          %s152 = smul.u32 2, %s25
          %s154 = ssub.s32 128, 128
          %155 = vsyncadd [#allocation3], %s154
          %s156 = smul.addr %s152, 64
          %s157 = scalar_lea.hbm %s0, %s156
          %s158 = sshll.u32 [#allocation2], 4
          %s159 = int_to_ptr.vmem [resolvable:$true] %s158
          %164 = dma.hbm_to_vmem [thread:$0]  %s157, 128, %s159, [#allocation3], 64, 64, 4
        $region16: #{tpu_custom_call.1} parent=11 // pred_fallthru
          _
      $region12: #{tpu_custom_call.1} parent=5 // pred_fallthru
        _
      %p165 = scmp.lt.s32.totalorder %s16, 3
      // Predicated region
      $region17: #{tpu_custom_call.1} parent=5 // pred_check
        %p166 = pneg %p165
      $region18: #{tpu_custom_call.1} parent=5 // pred_check_branch
        %168 = sbr.rel (%p166) target = $region20
      $region19: #{tpu_custom_call.1} parent=5 // pred_region
        // Predicated region
        $region21: #{tpu_custom_call.1} parent=19 // pred_check
          %p169 = pneg %p74
        $region22: #{tpu_custom_call.1} parent=19 // pred_check_branch
          %171 = sbr.rel (%p169) target = $region24
        $region23: #{tpu_custom_call.1} parent=19 // pred_region
          %s172 = sand.u32 %s64, 1
          %s173 = scalar_lea.sflag [#allocation6], %s172
          %s174 = sand.u32 %s64, 1
          %s175 = smul.addr %s174, 64
          %s176 = scalar_lea.vmem [#allocation5], %s175
          %s178 = ssub.s32 1024, 1024
          %179 = vsyncadd %s173, %s178
          %s180 = smul.addr %s24, 64
          %s181 = scalar_lea.hbm %s1, %s180
          %s182 = sshll.u32 %s176, 4
          %s183 = int_to_ptr.vmem [resolvable:$true] %s182
          %188 = dma.hbm_to_vmem [thread:$0]  %s181, 1024, %s183, %s173, 192, 64, 4
        $region24: #{tpu_custom_call.1} parent=19 // pred_fallthru
          _
        // Predicated region
        $region25: #{tpu_custom_call.1} parent=19 // pred_check
          %p189 = pneg %p100
        $region26: #{tpu_custom_call.1} parent=19 // pred_check_branch
          %191 = sbr.rel (%p189) target = $region28
        $region27: #{tpu_custom_call.1} parent=19 // pred_region
          %p192 = scmp.lt.s32.totalorder %s24, 2
          %s193 = scalar_select %p192, %s24, 2
          %s194 = scalar_lea.vmem %s2, %s193
        $region28: #{tpu_custom_call.1} parent=19 // pred_fallthru
          _
      $region20: #{tpu_custom_call.1} parent=5 // pred_fallthru
        _
      %p195 = scmp.le.s32.totalorder 1, %s16
      %p196 = scmp.lt.s32.totalorder %s16, 4
      %p197 = pnand %p195, %p196
      %p198 = pneg %p197
      // Predicated region
      $region29: #{tpu_custom_call.1} parent=5 // pred_check
        _
      $region30: #{tpu_custom_call.1} parent=5 // pred_check_branch
        %200 = sbr.rel (%p197) target = $region32
      $region31: #{tpu_custom_call.1} parent=5 // pred_region
        %s201 = ssub.s32 %s16, 1
        // Predicated region
        $region33: #{tpu_custom_call.1} parent=31 // pred_check
          %p202 = pneg %p54
        $region34: #{tpu_custom_call.1} parent=31 // pred_check_branch
          %204 = sbr.rel (%p202) target = $region36
        $region35: #{tpu_custom_call.1} parent=31 // pred_region
          %205 = dma.done [#allocation3], 128
        $region36: #{tpu_custom_call.1} parent=31 // pred_fallthru
          _
        %s206 = sand.u32 %s67, 1
        %s207 = scalar_lea.sflag [#allocation6], %s206
        %s208 = sand.u32 %s67, 1
        %s209 = smul.addr %s208, 64
        %s210 = scalar_lea.vmem [#allocation5], %s209
        // Predicated region
        $region37: #{tpu_custom_call.1} parent=31 // pred_check
          %p211 = pneg %p80
        $region38: #{tpu_custom_call.1} parent=31 // pred_check_branch
          %213 = sbr.rel (%p211) target = $region40
        $region39: #{tpu_custom_call.1} parent=31 // pred_region
          %214 = dma.done %s207, 1024
        $region40: #{tpu_custom_call.1} parent=31 // pred_fallthru
          _
        %p215 = pneg %p54
        %p216 = pneg %p51
        %s217 = sand.u32 %s67, 1
        %s218 = scalar_lea.sflag [#allocation6], %s217
        %s219 = sand.u32 %s67, 1
        %s220 = smul.addr %s219, 64
        %s221 = scalar_lea.vmem [#allocation5], %s220
        %p222 = pneg %p80
        %p223 = pneg %p77
        %p224 = scmp.lt.s32.totalorder %s26, 2
        %s225 = scalar_select %p224, %s26, 2
        %s226 = scalar_lea.vmem %s2, %s225
        %p227 = pneg %p106
        %p228 = pneg %p103
        %p229 = pneg %p134
        %p230 = pneg %p131
        %s231 = sand.u32 %s121, 1
        %s232 = scalar_lea.sflag [#allocation4], %s231
        %s233 = sand.u32 %s121, 1
        %s234 = smul.addr %s233, 8
        %s235 = scalar_lea.vmem [#allocation7], %s234
        %s236 = smul.u32 2, %s25
        %p237 = scmp.lt.s32.totalorder %s26, 2
        %s238 = scalar_select %p237, %s26, 2
        %s239 = scalar_lea.vmem %s2, %s238
        %s240 = smul.u32 2, %s25
        %v242 = vld [vmem:[#allocation2] sm:$0xf]
        %v243 = vld [vmem:[#allocation2 + $0x4] sm:$0xf]
        %v244 = vld [vmem:[%s210] sm:$0xf]
        %v245 = vld [vmem:[%s210 + $0x4] sm:$0xf]
        %v246 = vld [vmem:[%s210 + $0x8] sm:$0xf]
        %v247 = vld [vmem:[%s210 + $0xc] sm:$0xf]
        %v248 = vld [vmem:[%s210 + $0x10] sm:$0xf]
        %v249 = vld [vmem:[%s210 + $0x14] sm:$0xf]
        %v250 = vld [vmem:[%s210 + $0x18] sm:$0xf]
        %v251 = vld [vmem:[%s210 + $0x1c] sm:$0xf]
        %v252 = vld [vmem:[%s210 + $0x20] sm:$0xf]
        %v253 = vld [vmem:[%s210 + $0x24] sm:$0xf]
        %v254 = vld [vmem:[%s210 + $0x28] sm:$0xf]
        %v255 = vld [vmem:[%s210 + $0x2c] sm:$0xf]
        %v256 = vld [vmem:[%s210 + $0x30] sm:$0xf]
        %v257 = vld [vmem:[%s210 + $0x34] sm:$0xf]
        %v258 = vld [vmem:[%s210 + $0x38] sm:$0xf]
        %v259 = vld [vmem:[%s210 + $0x3c] sm:$0xf]
        %v260 = vld [vmem:[%s239] sm:$0x1]
        %v262 = vlaneseq
        %v263 = vshrl.u32 %v262, 7
        %v264 = vsub.s32 0, %v263
        %v265 = vrot.slane %v260, %v264
        %v269 = vunpack.c.l.b16 %v242
        %v270 = vunpack.c.l.b16 %v243
        %v271 = vpack.c.b16 %v270, %v269
        %v289 = vunpack.c.l.b16 %v244
        %v290 = vunpack.c.l.b16 %v245
        %v291 = vunpack.c.l.b16 %v246
        %v292 = vunpack.c.l.b16 %v247
        %v293 = vunpack.c.l.b16 %v248
        %v294 = vunpack.c.l.b16 %v249
        %v295 = vunpack.c.l.b16 %v250
        %v296 = vunpack.c.l.b16 %v251
        %v297 = vunpack.c.l.b16 %v252
        %v298 = vunpack.c.l.b16 %v253
        %v299 = vunpack.c.l.b16 %v254
        %v300 = vunpack.c.l.b16 %v255
        %v301 = vunpack.c.l.b16 %v256
        %v302 = vunpack.c.l.b16 %v257
        %v303 = vunpack.c.l.b16 %v258
        %v304 = vunpack.c.l.b16 %v259
        %v305 = vpack.c.b16 %v290, %v289
        %v306 = vpack.c.b16 %v292, %v291
        %v307 = vpack.c.b16 %v294, %v293
        %v308 = vpack.c.b16 %v296, %v295
        %v309 = vpack.c.b16 %v298, %v297
        %v310 = vpack.c.b16 %v300, %v299
        %v311 = vpack.c.b16 %v302, %v301
        %v312 = vpack.c.b16 %v304, %v303
        %321 = vmatprep.subr.bf16.mxu0 0
        %322 = vmatpush1.bf16.msra.mxu0 %v305
        %323 = vmatprep.subr.bf16.mxu0 0
        %324 = vmatpush1.bf16.msra.mxu0 %v306
        %325 = vmatprep.subr.bf16.mxu0 0
        %326 = vmatpush1.bf16.msra.mxu0 %v307
        %327 = vmatprep.subr.bf16.mxu0 0
        %328 = vmatpush1.bf16.msra.mxu0 %v308
        %329 = vmatprep.subr.bf16.mxu0 0
        %330 = vmatpush1.bf16.msra.mxu0 %v309
        %331 = vmatprep.subr.bf16.mxu0 0
        %332 = vmatpush1.bf16.msra.mxu0 %v310
        %333 = vmatprep.subr.bf16.mxu0 0
        %334 = vmatpush1.bf16.msra.mxu0 %v311
        %335 = vmatprep.subr.bf16.mxu0 0
        %336 = vmatpush1.bf16.msra.mxu0 %v312
        %337 = vmatprep.subr.bf16.mxu0 0
        %338 = vmatpush1.bf16.msra.mxu0 0
        %339 = vmatprep.subr.bf16.mxu0 0
        %340 = vmatpush1.bf16.msra.mxu0 0
        %341 = vmatprep.subr.bf16.mxu0 0
        %342 = vmatpush1.bf16.msra.mxu0 0
        %343 = vmatprep.subr.bf16.mxu0 0
        %344 = vmatpush1.bf16.msra.mxu0 0
        %345 = vmatprep.subr.bf16.mxu0 0
        %346 = vmatpush1.bf16.msra.mxu0 0
        %347 = vmatprep.subr.bf16.mxu0 0
        %348 = vmatpush1.bf16.msra.mxu0 0
        %349 = vmatprep.subr.bf16.mxu0 0
        %350 = vmatpush1.bf16.msra.mxu0 0
        %351 = vmatprep.subr.bf16.mxu0 0
        %352 = vmatpush1.bf16.msra.mxu0 0
        %353 = vmatprep.mubr.bf16.mxu0 0
        %354 = vmatmul.mubr.bf16.gmra.mrb[0].mxu0 %v271
        %v355 = vpop.f32.mrb[0].mxu0
        %v356 = vadd.f32 %v265, %v355
        %v357 = vpop.f32.mrb[0].mxu0
        %v358 = vpop.f32.mrb[0].mxu0
        %v359 = vadd.f32 %v265, %v358
        %v360 = vpop.f32.mrb[0].mxu0
        %361 = vdwg.mxu0
        %v362 = vpack.c.bf16 %v359, %v356
        %v364 = vunpack.c.l.b16 %v362
        %v365 = vunpack.c.h.b16 %v362
        %v366 = vpack.c.b16 %v364, %v364
        %v367 = vpack.c.b16 %v365, %v365
        %370 = vst [vmem:[%s235] sm:$0xf] %v366
        %371 = vst [vmem:[%s235 + $0x4] sm:$0xf] %v367
        %s372 = sand.u32 %s121, 1
        %s373 = scalar_lea.sflag [#allocation4], %s372
        %s374 = sand.u32 %s121, 1
        %s375 = smul.addr %s374, 8
        %s376 = scalar_lea.vmem [#allocation7], %s375
        // Predicated region
        $region41: #{tpu_custom_call.1} parent=31 // pred_check
          %p377 = pneg %p131
        $region42: #{tpu_custom_call.1} parent=31 // pred_check_branch
          %379 = sbr.rel (%p377) target = $region44
        $region43: #{tpu_custom_call.1} parent=31 // pred_region
          %s380 = smul.u32 2, %s25
          %s382 = ssub.s32 128, 128
          %383 = vsyncadd %s373, %s382
          %s384 = smul.addr %s380, 3
          %s385 = sadd.s32 %s26, %s384
          %s386 = smul.addr %s385, 64
          %s387 = scalar_lea.hbm %s3, %s386
          %s388 = sshll.u32 %s376, 4
          %s389 = int_to_ptr.vmem [resolvable:$true] %s388
          %394 = dma.vmem_to_hbm [thread:$0]  %s389, 128, %s387, %s373, 64, 192, 4
        $region44: #{tpu_custom_call.1} parent=31 // pred_fallthru
          _
      $region32: #{tpu_custom_call.1} parent=5 // pred_fallthru
        _
      %p395 = scmp.le.s32.totalorder 2, %s16
      // Predicated region
      $region45: #{tpu_custom_call.1} parent=5 // pred_check
        %p396 = pneg %p395
      $region46: #{tpu_custom_call.1} parent=5 // pred_check_branch
        %398 = sbr.rel (%p396) target = $region48
      $region47: #{tpu_custom_call.1} parent=5 // pred_region
        %s399 = ssub.s32 %s16, 2
        // Predicated region
        $region49: #{tpu_custom_call.1} parent=47 // pred_check
          %p400 = pneg %p137
        $region50: #{tpu_custom_call.1} parent=47 // pred_check_branch
          %402 = sbr.rel (%p400) target = $region52
        $region51: #{tpu_custom_call.1} parent=47 // pred_region
          %s403 = sand.u32 %s122, 1
          %s404 = scalar_lea.sflag [#allocation4], %s403
          %s405 = sand.u32 %s122, 1
          %s406 = smul.addr %s405, 8
          %s407 = scalar_lea.vmem [#allocation7], %s406
          %408 = dma.done %s404, 128
        $region52: #{tpu_custom_call.1} parent=47 // pred_fallthru
          _
      $region48: #{tpu_custom_call.1} parent=5 // pred_fallthru
        _
    $region6: #{tpu_custom_call.1} parent=1 // loop_footer
      %s20 = sadd.s32 1, %s16
    $region7: #{tpu_custom_call.1} parent=1 // loop_footer_branch
      %15 = sbr.rel target = $region3
    $region8: #{tpu_custom_call.1} parent=1 // loop_exit
      _
    %409 = vsyncpa [#allocation3], 1
    %s410 = scalar_lea.sflag [#allocation3], 1
    %411 = vsyncpa %s410, 1
    %412 = vsyncpa [#allocation6], 1
    %s413 = scalar_lea.sflag [#allocation6], 1
    %414 = vsyncpa %s413, 1
    %415 = vsyncpa [#allocation4], 1
    %s416 = scalar_lea.sflag [#allocation4], 1
    %417 = vsyncpa %s416, 1

</llo_original>
